<compile_context>
chip_gen: v5e
topology: v5e:2x2
jax: 0.10.0
libtpu: 0.0.40
codegen_flags: <defaults>
</compile_context>

<pallas_src>
import jax
import jax.numpy as jnp
import numpy as np
from jax.experimental import pallas as pl
from jax.experimental.pallas import tpu as pltpu


# ----------------------------- Pallas kernel ---------------------------------

def _make_contract_kernel(tk, n_p, t_resident):
    """out[x-block, :] += Ak_T[k, x-block, n-block] @ T[k, n-block, :].

    grid = (x tiles [parallel], K [arbitrary], N_P // tk [arbitrary]).
      a_ref : [tm, tk]                       (head k, rows x-block, cols n-block)
      t_ref : [K*N_P, DY_P] (resident) or [tk, DY_P] (streamed)
      o_ref : [tm, DY_P] f32, revisited across (k, n) -> accumulate in place.
    """

    def kernel(a_ref, t_ref, o_ref):
        k = pl.program_id(1)
        n = pl.program_id(2)

        @pl.when((k == 0) & (n == 0))
        def _init():
            o_ref[...] = jnp.zeros_like(o_ref)

        if t_resident:
            # T is DMA'd into VMEM once (constant block index); slice the
            # reduction window for head k / row-block n in-kernel.
            row0 = pl.multiple_of(k * n_p + n * tk, 128)
            t_blk = t_ref[pl.ds(row0, tk), :]
        else:
            t_blk = t_ref[...]

        o_ref[...] += jnp.dot(a_ref[...], t_blk,
                              preferred_element_type=jnp.float32)

    return kernel


# ------------------------------ JAX glue --------------------------------------

def _round_up(x, m):
    return ((x + m - 1) // m) * m


def _pick_tile(total, desired, granule=128):
    """Largest multiple of `granule` <= desired that evenly divides `total`
    (`total` is a multiple of `granule`, so this always terminates)."""
    t = min(desired, total)
    t = max(granule, (t // granule) * granule)
    while total % t:
        t -= granule
    return t


def get_laplacian(adj):
    """adj: dense [N, N] adjacency without self loops (stands in for the DGL graph)."""
    deg = jnp.clip(jnp.sum(adj, axis=1), 1.0, None)        # in-degrees, clamp(min=1)
    d_inv_sqrt = 1.0 / jnp.sqrt(deg)
    d_norm = d_inv_sqrt[:, None] * adj * d_inv_sqrt[None, :]
    return jnp.eye(adj.shape[0], dtype=adj.dtype) - d_norm


def cheb_polynomial(laplacian, K):
    """Chebyshev polynomials T_0..T_{K-1} of a square matrix -> [K, N, N] f32."""
    N = laplacian.shape[0]
    mats = [jnp.eye(N, dtype=jnp.float32)]
    if K >= 2:
        mats.append(laplacian.astype(jnp.float32))
    for k in range(2, K):
        mats.append(2.0 * laplacian @ mats[k - 1] - mats[k - 2])
    return jnp.stack(mats[:K], axis=0)


def relevance_propagation_chebnet(a, r, adj, W, K, *,
                                  mxu_dtype=jnp.bfloat16,
                                  tm=512, tk=256,
                                  vmem_limit_bytes=None,
                                  t_resident=None):
    """LRP through a ChebConv layer.

    a: [N, in_feats] (only its length is used, as in the torch module),
    r: [N, out_feats], adj: [N, N] dense adjacency (no self loops),
    W: [out_feats, K*in_feats].
    Returns [N, in_feats] relevance (f32).
    """
    assert W.shape[1] % K == 0
    N = a.shape[0]
    out_feats = W.shape[0]
    dW = W.shape[1] // K
    dimY, dimJ = dW, out_feats

    # rho(Wk)[k, y, j] = |W[j, k*dW + y]|     -> [K, dimY, dimJ]  (f32)
    rhoW = jnp.transpose(jnp.abs(W.astype(jnp.float32)).reshape(out_feats, K, dW),
                         (1, 2, 0))

    # ---- Chebyshev polynomials, born padded AND transposed -------------------
    # Running the recursion on padded L^T gives Ak_T[k, x, i] = Ak[k, i, x]
    # directly (Tk(L^T) = Tk(L)^T), so the largest tensor never needs an HBM
    # relayout or a separate padding copy.
    # TODO(synk): for static graphs, cache Ak_T across LRP calls.
    N_P = _round_up(max(N, 128), 128)
    DY_P = _round_up(dimY, 128)
    L = get_laplacian(adj)                                   # [N, N]
    L_T_pad = jnp.zeros((N_P, N_P), jnp.float32).at[:N, :N].set(
        L.T.astype(jnp.float32))
    Ak_T = cheb_polynomial(L_T_pad, K)                       # [K, N_P, N_P] f32

    # ---- Z and s (hoisted cross-lane reductions; XLA, f32) --------------------
    # rowSum over x of Ak[k, i, x] == sum over axis 1 of Ak_T; padded entries
    # contribute exactly zero for i < N.
    row_sum_a = jnp.sum(Ak_T, axis=1)[:, :N]                 # [K, N]
    col_sum_w = jnp.sum(rhoW, axis=1)                        # [K, dimJ]
    z = jnp.einsum('kn,kj->nj', row_sum_a, col_sum_w)        # [N, dimJ] == U.sum((2,3))
    # TODO(synk): the original module has no eps/sign stabilization on Z; keep
    # exact semantics (can produce inf/NaN if Z ~ 0 for adversarial weights).
    s = r.astype(jnp.float32) / z                            # [N, dimJ], stays f32

    # ---- T[k, i, y] = sum_j s[i, j] * rhoW[k, y, j]  (tiny; plain XLA) --------
    T = jnp.einsum('ij,kyj->kiy', s, rhoW)                   # [K, N, dimY] f32
    T_p = jnp.zeros((K, N_P, DY_P), jnp.float32).at[:, :N, :dimY].set(T)
    T2 = T_p.reshape(K * N_P, DY_P).astype(mxu_dtype)        # row-major, no transpose

    A_op = Ak_T.astype(mxu_dtype)                            # only cast of the big tensor

    # ---- tile selection (always divides exactly; >=2 parallel tiles if possible)
    tm_desired = min(tm, N_P)
    if N_P >= 2 * 128:
        tm_desired = min(tm_desired, N_P // 2)               # v7x megacore: >=2 x tiles
    tm_eff = _pick_tile(N_P, tm_desired)
    tk_eff = _pick_tile(N_P, tk)
    assert N_P % tm_eff == 0 and N_P % tk_eff == 0
    n_red = N_P // tk_eff

    # ---- VMEM budget (per generation) and T residency decision ----------------
    if vmem_limit_bytes is None:
        try:
            phys = int(pltpu.get_tpu_info().vmem_capacity_bytes)
            vmem_limit_bytes = min(64 * 1024 * 1024, phys // 2)
        except Exception:
            vmem_limit_bytes = 32 * 1024 * 1024
    itemsize = np.dtype(mxu_dtype).itemsize
    if t_resident is None:
        t_footprint = 2 * K * N_P * DY_P * itemsize          # conservative: 2 buffers
        tile_footprint = 2 * tm_eff * tk_eff * itemsize + 2 * tm_eff * DY_P * 4
        t_resident = (t_footprint + tile_footprint) <= int(0.75 * vmem_limit_bytes)

    a_spec = pl.BlockSpec((None, tm_eff, tk_eff), lambda x, k, n: (k, x, n))
    if t_resident:
        # Whole T slab, constant block index -> DMA'd once, sliced in-kernel.
        # TODO(synk): pipeline_mode=pl.Buffered(1) would halve this footprint
        # (helps v7x's 64 MiB VMEM); left off for portability.
        t_spec = pl.BlockSpec((K * N_P, DY_P), lambda x, k, n: (0, 0))
    else:
        t_spec = pl.BlockSpec((tk_eff, DY_P), lambda x, k, n: (k * n_red + n, 0))
    out_spec = pl.BlockSpec((tm_eff, DY_P), lambda x, k, n: (x, 0))

    kernel = _make_contract_kernel(tk_eff, N_P, t_resident)
    out_p = pl.pallas_call(
        kernel,
        out_shape=jax.ShapeDtypeStruct((N_P, DY_P), jnp.float32),
        grid=(N_P // tm_eff, K, n_red),
        in_specs=[a_spec, t_spec],
        out_specs=out_spec,
        compiler_params=pltpu.CompilerParams(
            dimension_semantics=("parallel", "arbitrary", "arbitrary"),
            vmem_limit_bytes=vmem_limit_bytes),
    )(A_op, T2)

    return out_p[:N, :dimY]


# ----------------------- numpy reference (for checking) ----------------------

def reference(a, r, adj, W, K):
    """Direct transcription of the torch module's U-based math (f32)."""
    dW = W.shape[1] // K
    rhoW = np.stack([np.abs(np.asarray(W[:, k * dW:(k + 1) * dW], np.float32)).T
                     for k in range(K)], axis=0)
    Ak = np.asarray(cheb_polynomial(get_laplacian(adj), K), np.float32)
    U = np.einsum('kix,kyj->ijxy', Ak, rhoW)                  # [N, dimJ, N, dimY]
    Z = U.sum(axis=(2, 3))
    return np.einsum('ijxy,ij->xy', U, np.asarray(r, np.float32) / Z)


def _ring_graph(n, chords):
    adj = np.zeros((n, n), np.float32)
    for i in range(n):
        for d in chords:
            j = (i + d) % n
            adj[i, j] = 1.0
            adj[j, i] = 1.0
    return jnp.asarray(adj)


# --------------------------------- main ---------------------------------------

if __name__ == "__main__":
    K = 3
    N = 16            # num graph nodes
    in_feats = 8      # dimY
    out_feats = 8     # dimJ

    key = jax.random.PRNGKey(0)
    k_w, k_r, k_a = jax.random.split(key, 3)

    # ChebConv linear weight [out_feats, K*in_feats]; scale the K blocks
    # differently so the LRP denominator Z stays comfortably away from zero.
    blocks = [jax.random.normal(jax.random.fold_in(k_w, k),
                                (out_feats, in_feats), jnp.float32) * sc
              for k, sc in enumerate([1.5, 1.0, 0.5])]
    W = jnp.concatenate(blocks, axis=1)

    adj = _ring_graph(N, (1, 3))                              # symmetric, no self loops
    a = jax.random.normal(k_a, (N, in_feats), jnp.float32)    # layer input (shape only)
    r = jax.random.normal(k_r, (N, out_feats), jnp.float32)   # upstream relevance

    ref = reference(a, r, adj, W, K)

    # 1) f32 MXU operands: exact forward-pass semantics of the torch module.
    out_f32 = jax.block_until_ready(
        relevance_propagation_chebnet(a, r, adj, W, K, mxu_dtype=jnp.float32))
    np.testing.assert_allclose(np.asarray(out_f32), ref, rtol=1e-2, atol=1e-3)

    # 2) default bf16 operands (f32 accumulation): v6e/v7x fast path.
    out_bf16 = jax.block_until_ready(
        relevance_propagation_chebnet(a, r, adj, W, K))
    np.testing.assert_allclose(np.asarray(out_bf16), ref, rtol=5e-2, atol=5e-2)

    # 3) streaming-T fallback path (exercises the non-resident kernel variant).
    out_stream = jax.block_until_ready(
        relevance_propagation_chebnet(a, r, adj, W, K, mxu_dtype=jnp.float32,
                                      t_resident=False))
    np.testing.assert_allclose(np.asarray(out_stream), ref, rtol=1e-2, atol=1e-3)

    # 4) larger graph (N=300 -> N_P=384): multi-tile grid, >=2 parallel x tiles.
    N2 = 300
    adj2 = _ring_graph(N2, (1, 5, 17))
    a2 = jax.random.normal(jax.random.fold_in(k_a, 1), (N2, in_feats), jnp.float32)
    r2 = jax.random.normal(jax.random.fold_in(k_r, 1), (N2, out_feats), jnp.float32)
    ref2 = reference(a2, r2, adj2, W, K)
    out2 = jax.block_until_ready(
        relevance_propagation_chebnet(a2, r2, adj2, W, K, mxu_dtype=jnp.float32))
    np.testing.assert_allclose(np.asarray(out2), ref2, rtol=1e-2, atol=1e-3)

    print("KERNEL_OK")
</pallas_src>

<mosaic_0001>
module attributes {stable_mosaic.version = 11 : i64} {
  func.func @kernel(%arg0: i32, %arg1: i32, %arg2: i32, %arg3: memref<1x128x128xf32, #tpu.memory_space<vmem>>, %arg4: memref<384x128xf32, #tpu.memory_space<vmem>>, %arg5: memref<128x128xf32, #tpu.memory_space<vmem>>) attributes {dimension_semantics = [#tpu.dimension_semantics<parallel>, #tpu.dimension_semantics<arbitrary>, #tpu.dimension_semantics<arbitrary>], iteration_bounds = array<i64: 1, 3, 1>, scalar_prefetch = 0 : i64, scratch_operands = 0 : i64, tpu.core_type = #tpu.core_type<tc>, window_params = [{transform_indices = @transform_0, window_bounds = array<i64: 1, 128, 128>}, {pipeline_mode = #tpu.pipeline_mode<synchronous>, transform_indices = @transform_1, window_bounds = array<i64: 384, 128>}, {transform_indices = @transform_2, window_bounds = array<i64: 128, 128>}]} {
    %c0_i32 = arith.constant 0 : i32
    %0 = arith.cmpi eq, %arg1, %c0_i32 : i32
    %c0_i32_0 = arith.constant 0 : i32
    %1 = arith.cmpi eq, %arg2, %c0_i32_0 : i32
    %2 = arith.andi %0, %1 : i1
    %3 = arith.extui %2 : i1 to i32
    %c0_i32_1 = arith.constant 0 : i32
    %4 = arith.cmpi ne, %3, %c0_i32_1 : i32
    scf.if %4 {
      %cst_10 = arith.constant 0.000000e+00 : f32
      %17 = vector.broadcast %cst_10 : f32 to vector<128x128xf32>
      %c0_11 = arith.constant 0 : index
      %c0_12 = arith.constant 0 : index
      %18 = vector.load %arg5[%c0_11, %c0_12] : memref<128x128xf32, #tpu.memory_space<vmem>>, vector<128x128xf32>
      tpu.vector_store %arg5[%c0_11, %c0_12], %17 {strides = array<i32>} : memref<128x128xf32, #tpu.memory_space<vmem>>, vector<128x128xf32>,
    } else {
    }
    %c128_i32 = arith.constant 128 : i32
    %5 = arith.muli %arg1, %c128_i32 : i32
    %c128_i32_2 = arith.constant 128 : i32
    %6 = arith.muli %arg2, %c128_i32_2 : i32
    %7 = arith.addi %5, %6 : i32
    %8 = tpu.assume_multiple %7, 128 : i32
    %9 = arith.index_cast %8 : i32 to index
    %c0 = arith.constant 0 : index
    %10 = vector.load %arg4[%9, %c0] : memref<384x128xf32, #tpu.memory_space<vmem>>, vector<128x128xf32>
    %c0_3 = arith.constant 0 : index
    %c0_4 = arith.constant 0 : index
    %11 = vector.load %arg5[%c0_3, %c0_4] : memref<128x128xf32, #tpu.memory_space<vmem>>, vector<128x128xf32>
    %c0_5 = arith.constant 0 : index
    %c0_6 = arith.constant 0 : index
    %c0_7 = arith.constant 0 : index
    %12 = vector.load %arg3[%c0_5, %c0_6, %c0_7] : memref<1x128x128xf32, #tpu.memory_space<vmem>>, vector<1x128x128xf32>
    %13 = vector.shape_cast %12 : vector<1x128x128xf32> to vector<128x128xf32>
    %cst = arith.constant dense<0.000000e+00> : vector<128x128xf32>
    %14 = tpu.matmul %13, %10, %cst {dimension_numbers = #tpu.dot_dimension_numbers<[1], [0], [0], [1], [0, 0, 1, 1], [], []>} : vector<128x128xf32>, vector<128x128xf32>, vector<128x128xf32> -> vector<128x128xf32>
    %15 = arith.addf %11, %14 : vector<128x128xf32>
    %c0_8 = arith.constant 0 : index
    %c0_9 = arith.constant 0 : index
    %16 = vector.load %arg5[%c0_8, %c0_9] : memref<128x128xf32, #tpu.memory_space<vmem>>, vector<128x128xf32>
    tpu.vector_store %arg5[%c0_8, %c0_9], %15 {strides = array<i32>} : memref<128x128xf32, #tpu.memory_space<vmem>>, vector<128x128xf32>,
    return
  }
  func.func @transform_0(%arg0: i32, %arg1: i32, %arg2: i32) -> (i32, i32, i32) {
    %c0_i32 = arith.constant 0 : i32
    return %arg1, %arg0, %arg2 : i32, i32, i32
  }
  func.func @transform_1(%arg0: i32, %arg1: i32, %arg2: i32) -> (i32, i32) {
    %c0_i32 = arith.constant 0 : i32
    %c0_i32_0 = arith.constant 0 : i32
    %c0_i32_1 = arith.constant 0 : i32
    return %c0_i32, %c0_i32_0 : i32, i32
  }
  func.func @transform_2(%arg0: i32, %arg1: i32, %arg2: i32) -> (i32, i32) {
    %c0_i32 = arith.constant 0 : i32
    %c0_i32_0 = arith.constant 0 : i32
    return %arg0, %c0_i32 : i32, i32
  }
}

</mosaic_0001>

<llo_original>
// kernel: tpu_custom_call.1
$region0: #{tpu_custom_call.1}
  #allocation0 [shape = 'u32[]', space=smem, size = 0x4, offset = 0x4, fixed_abs, tag = 'smem constant byte address 0x4 - core index']
  #allocation1 [shape = 'u32[72,128]{1,0:T(1,128)}', space=vmem, size = 0x9000, scoped, tag = 'internal scratch']
  %s0 = inlined_call_operand.hbm [shape: f32[3,128,128], index: 0, kind: input, shape index: {}]
  %s1 = inlined_call_operand.hbm [shape: f32[384,128], index: 1, kind: input, shape index: {}]
  %s2 = inlined_call_operand.hbm [shape: f32[128,128], index: 2, kind: output, shape index: {}]
  %s3 = sld [smem:[#allocation0]]
  $region53: #{tpu_custom_call.1} parent=0
    _
  %s5 = ssub.s32 1, %s3
  %s6 = scalar_select 0, %s5, %s3
  $region1: #{tpu_custom_call.1} parent=0
    #allocation2 [shape = 'u8[131072]{0}', space=vmem, size = 0x20000, scoped, tag = 'input window, operand 0']
    #allocation3 [shape = 's32[2]{0}', space=sflag, size = 0x8, scoped, tag = 'scoped memory for tpu_custom_call.1']
    #allocation4 [shape = 's32[2]{0}', space=sflag, size = 0x8, scoped, tag = 'scoped memory for tpu_custom_call.1']
    #allocation5 [shape = 'u8[196608]{0}', space=vmem, size = 0x30000, scoped, tag = 'input window, operand 1, single buffered']
    #allocation6 [shape = 's32[1]{0}', space=sflag, size = 0x4, scoped, tag = 'scoped memory for tpu_custom_call.1']
    #allocation7 [shape = 'u8[65536]{0}', space=vmem, size = 0x10000, scoped, tag = 'output window, operand 0, single buffered']
    %7 = vsyncpa [#allocation3], 0
    %s8 = scalar_lea.sflag [#allocation3], 1
    %9 = vsyncpa %s8, 0
    %10 = vsyncpa [#allocation6], 0
    %11 = vsyncpa [#allocation4], 0
    loop: start=0, step=1, limit=5
    $region2: #{tpu_custom_call.1} parent=1 // loop_pre_header
      _
    $region3: #{tpu_custom_call.1} parent=1 // loop_header
      %s13 = sphi 0, %s17
      %p14 = scmp.ge.s32.totalorder %s13, 5
      %s20 = sphi 0, %s39
      %s21 = sphi 0, %s35
      %s22 = sphi 0, %s31
      %s23 = sphi 0, %s20
      %s24 = sphi 0, %s21
      %s25 = sphi 0, %s22
      %s26 = sphi 0, %s23
      %s27 = sphi 0, %s24
      %s28 = sphi 0, %s25
      %s46 = sphi 0, %s48
      %s49 = sphi 0, %s46
      %s50 = sphi 0, %s49
      %s66 = sphi 0, %s50
      %s70 = sphi 0, %s70
      %s72 = sphi 0, %s70
      %s73 = sphi 0, %s72
      %s87 = sphi 0, %s73
      %s93 = sphi 0, %s95
      %s96 = sphi 0, %s93
      %s97 = sphi 0, %s96
      %s113 = sphi 0, %s97
    $region4: #{tpu_custom_call.1} parent=1 // loop_header_branch
      %16 = sbr.rel (%p14) target = $region8
    $region5: #{tpu_custom_call.1} parent=1 // loop_body
      %s18 = ssub.s32 %s13, 1
      %s19 = ssub.s32 %s13, 2
      %s29 = sadd.s32 1, %s22
      %p30 = scmp.ge.s32.totalorder %s29, 1
      %s31 = scalar_select %p30, 0, %s29
      %s32 = sadd.s32 1, %s21
      %s33 = scalar_select %p30, %s32, %s21
      %p34 = scmp.ge.s32.totalorder %s33, 3
      %s35 = scalar_select %p34, 0, %s33
      %s36 = sadd.s32 1, %s20
      %s37 = scalar_select %p34, %s36, %s20
      %p38 = scmp.ge.s32.totalorder %s37, 1
      %s39 = scalar_select %p38, 0, %s37
      %s40 = ssub.s32 %s21, %s35
      %s41 = ssub.s32 %s20, %s39
      %s42 = sor.u32 %s40, %s41
      %s43 = ssub.s32 %s22, %s31
      %s44 = sor.u32 %s42, %s43
      %p45 = scmp.eq.s32.totalorder %s44, 0
      %s47 = sadd.s32 %s46, 1
      %s48 = scalar_select %p45, %s46, %s47
      %p51 = pneg %p45
      %p52 = scmp.eq.s32.totalorder %s13, 2
      %p53 = por %p51, %p52
      %p54 = scmp.ne.s32.totalorder %s46, %s49
      %p55 = scmp.eq.s32.totalorder %s13, 0
      %p56 = por %p54, %p55
      %p57 = scmp.ne.s32.totalorder %s46, %s49
      %p58 = scmp.eq.s32.totalorder %s18, 2
      %p59 = por %p57, %p58
      %p60 = scmp.ne.s32.totalorder %s49, %s50
      %p61 = scmp.eq.s32.totalorder %s18, 0
      %p62 = por %p60, %p61
      %p63 = scmp.ne.s32.totalorder %s49, %s50
      %p64 = scmp.eq.s32.totalorder %s19, 2
      %p65 = por %p63, %p64
      %p67 = scmp.ne.s32.totalorder %s50, %s66
      %p68 = scmp.eq.s32.totalorder %s19, 0
      %p69 = por %p67, %p68
      %s71 = sadd.s32 %s70, 1
      %p74 = scmp.eq.s32.totalorder %s13, 2
      %p75 = scmp.ne.s32.totalorder %s70, %s72
      %p76 = scmp.eq.s32.totalorder %s13, 0
      %p77 = por %p75, %p76
      %p78 = scmp.ne.s32.totalorder %s70, %s72
      %p79 = scmp.eq.s32.totalorder %s18, 2
      %p80 = por %p78, %p79
      %p81 = scmp.ne.s32.totalorder %s72, %s73
      %p82 = scmp.eq.s32.totalorder %s18, 0
      %p83 = por %p81, %p82
      %p84 = scmp.ne.s32.totalorder %s72, %s73
      %p85 = scmp.eq.s32.totalorder %s19, 2
      %p86 = por %p84, %p85
      %p88 = scmp.ne.s32.totalorder %s73, %s87
      %p89 = scmp.eq.s32.totalorder %s19, 0
      %p90 = por %p88, %p89
      %s91 = ssub.s32 %s20, %s39
      %p92 = scmp.eq.s32.totalorder %s91, 0
      %s94 = sadd.s32 %s93, 1
      %s95 = scalar_select %p92, %s93, %s94
      %p98 = pneg %p92
      %p99 = scmp.eq.s32.totalorder %s13, 2
      %p100 = por %p98, %p99
      %p101 = scmp.ne.s32.totalorder %s93, %s96
      %p102 = scmp.eq.s32.totalorder %s13, 0
      %p103 = por %p101, %p102
      %p104 = scmp.ne.s32.totalorder %s93, %s96
      %p105 = scmp.eq.s32.totalorder %s18, 2
      %p106 = por %p104, %p105
      %p107 = scmp.ne.s32.totalorder %s96, %s97
      %p108 = scmp.eq.s32.totalorder %s18, 0
      %p109 = por %p107, %p108
      %p110 = scmp.ne.s32.totalorder %s96, %s97
      %p111 = scmp.eq.s32.totalorder %s19, 2
      %p112 = por %p110, %p111
      %p114 = scmp.ne.s32.totalorder %s97, %s113
      %p115 = scmp.eq.s32.totalorder %s19, 0
      %p116 = por %p114, %p115
      %p117 = scmp.le.s32.totalorder 1, %s13
      %p118 = scmp.lt.s32.totalorder %s13, 4
      %p119 = pnand %p117, %p118
      %p120 = pneg %p119
      // Predicated region
      $region9: #{tpu_custom_call.1} parent=5 // pred_check
        _
      $region10: #{tpu_custom_call.1} parent=5 // pred_check_branch
        %122 = sbr.rel (%p119) target = $region12
      $region11: #{tpu_custom_call.1} parent=5 // pred_region
        %s123 = ssub.s32 %s13, 1
        // Predicated region
        $region13: #{tpu_custom_call.1} parent=11 // pred_check
          %p124 = pneg %p83
        $region14: #{tpu_custom_call.1} parent=11 // pred_check_branch
          %126 = sbr.rel (%p124) target = $region16
        $region15: #{tpu_custom_call.1} parent=11 // pred_region
          %128 = vsyncadd [#allocation6], 0
          %s129 = sshll.u32 %s1, 4
          %s130 = int_to_ptr.hbm [resolvable:$true] %s129
          %s131 = sshll.u32 [#allocation5], 4
          %s132 = int_to_ptr.vmem [resolvable:$true] %s131
          %137 = dma.hbm_to_vmem [thread:$0]  %s130, 6144, %s132, [#allocation6], 128, 128, 8
        $region16: #{tpu_custom_call.1} parent=11 // pred_fallthru
          _
      $region12: #{tpu_custom_call.1} parent=5 // pred_fallthru
        _
      %p138 = scmp.lt.s32.totalorder %s13, 3
      // Predicated region
      $region17: #{tpu_custom_call.1} parent=5 // pred_check
        %p139 = pneg %p138
      $region18: #{tpu_custom_call.1} parent=5 // pred_check_branch
        %141 = sbr.rel (%p139) target = $region20
      $region19: #{tpu_custom_call.1} parent=5 // pred_region
        // Predicated region
        $region21: #{tpu_custom_call.1} parent=19 // pred_check
          %p142 = pneg %p56
        $region22: #{tpu_custom_call.1} parent=19 // pred_check_branch
          %144 = sbr.rel (%p142) target = $region24
        $region23: #{tpu_custom_call.1} parent=19 // pred_region
          %s145 = sand.u32 %s46, 1
          %s146 = scalar_lea.sflag [#allocation3], %s145
          %s147 = sand.u32 %s46, 1
          %s148 = smul.addr %s147, 128
          %s149 = scalar_lea.vmem [#allocation2], %s148
          %s150 = smul.u32 16, %s20
          %152 = vsyncadd %s146, 0
          %s153 = sadd.s32 %s22, %s150
          %s154 = smul.addr %s21, 16
          %s155 = sadd.s32 %s153, %s154
          %s156 = smul.addr %s155, 8
          %s157 = scalar_lea.hbm %s0, %s156
          %s158 = sshll.u32 %s157, 4
          %s159 = int_to_ptr.hbm [resolvable:$true] %s158
          %s160 = sshll.u32 %s149, 4
          %s161 = int_to_ptr.vmem [resolvable:$true] %s160
          %166 = dma.hbm_to_vmem [thread:$0]  %s159, 2048, %s161, %s146, 128, 128, 8
        $region24: #{tpu_custom_call.1} parent=19 // pred_fallthru
          _
      $region20: #{tpu_custom_call.1} parent=5 // pred_fallthru
        _
      %p167 = scmp.le.s32.totalorder 1, %s13
      %p168 = scmp.lt.s32.totalorder %s13, 4
      %p169 = pnand %p167, %p168
      %p170 = pneg %p169
      // Predicated region
      $region25: #{tpu_custom_call.1} parent=5 // pred_check
        _
      $region26: #{tpu_custom_call.1} parent=5 // pred_check_branch
        %172 = sbr.rel (%p169) target = $region28
      $region27: #{tpu_custom_call.1} parent=5 // pred_region
        %s173 = ssub.s32 %s13, 1
        %s174 = sand.u32 %s49, 1
        %s175 = scalar_lea.sflag [#allocation3], %s174
        %s176 = sand.u32 %s49, 1
        %s177 = smul.addr %s176, 128
        %s178 = scalar_lea.vmem [#allocation2], %s177
        // Predicated region
        $region29: #{tpu_custom_call.1} parent=27 // pred_check
          %p179 = pneg %p62
        $region30: #{tpu_custom_call.1} parent=27 // pred_check_branch
          %181 = sbr.rel (%p179) target = $region32
        $region31: #{tpu_custom_call.1} parent=27 // pred_region
          %183 = dma.done %s175, 2048
        $region32: #{tpu_custom_call.1} parent=27 // pred_fallthru
          _
        // Predicated region
        $region33: #{tpu_custom_call.1} parent=27 // pred_check
          %p184 = pneg %p83
        $region34: #{tpu_custom_call.1} parent=27 // pred_check_branch
          %186 = sbr.rel (%p184) target = $region36
        $region35: #{tpu_custom_call.1} parent=27 // pred_region
          %188 = dma.done [#allocation6], 6144
        $region36: #{tpu_custom_call.1} parent=27 // pred_fallthru
          _
        %s189 = sand.u32 %s49, 1
        %s190 = scalar_lea.sflag [#allocation3], %s189
        %s191 = sand.u32 %s49, 1
        %s192 = smul.addr %s191, 128
        %s193 = scalar_lea.vmem [#allocation2], %s192
        %p194 = pneg %p62
        %p195 = pneg %p59
        %p196 = pneg %p83
        %p197 = pneg %p80
        %p198 = pneg %p109
        %p199 = pneg %p106
        %s200 = smul.u32 16, %s23
        %s201 = smul.u32 16, %s23
        %p202 = scmp.eq.s32.totalorder %s24, 0
        %p203 = scmp.eq.s32.totalorder %s25, 0
        %p204 = pnand %p202, %p203
        %p205 = pneg %p204
        // Predicated region
        $region37: #{tpu_custom_call.1} parent=27 // pred_check
          _
        $region38: #{tpu_custom_call.1} parent=27 // pred_check_branch
          %207 = sbr.rel (%p204) target = $region40
        $region39: #{tpu_custom_call.1} parent=27 // pred_region
          %208 = vst [vmem:[#allocation7] sm:$0xff] 0.0
          %209 = vst [vmem:[#allocation7 + $0x8] sm:$0xff] 0.0
          %210 = vst [vmem:[#allocation7 + $0x10] sm:$0xff] 0.0
          %211 = vst [vmem:[#allocation7 + $0x18] sm:$0xff] 0.0
          %212 = vst [vmem:[#allocation7 + $0x20] sm:$0xff] 0.0
          %213 = vst [vmem:[#allocation7 + $0x28] sm:$0xff] 0.0
          %214 = vst [vmem:[#allocation7 + $0x30] sm:$0xff] 0.0
          %215 = vst [vmem:[#allocation7 + $0x38] sm:$0xff] 0.0
          %216 = vst [vmem:[#allocation7 + $0x40] sm:$0xff] 0.0
          %217 = vst [vmem:[#allocation7 + $0x48] sm:$0xff] 0.0
          %218 = vst [vmem:[#allocation7 + $0x50] sm:$0xff] 0.0
          %219 = vst [vmem:[#allocation7 + $0x58] sm:$0xff] 0.0
          %220 = vst [vmem:[#allocation7 + $0x60] sm:$0xff] 0.0
          %221 = vst [vmem:[#allocation7 + $0x68] sm:$0xff] 0.0
          %222 = vst [vmem:[#allocation7 + $0x70] sm:$0xff] 0.0
          %223 = vst [vmem:[#allocation7 + $0x78] sm:$0xff] 0.0
        $region40: #{tpu_custom_call.1} parent=27 // pred_fallthru
          _
        %s224 = smul.u32 %s24, 128
        %s225 = smul.u32 %s25, 128
        %s226 = sadd.s32 %s224, %s225
        %s227 = scalar_lea.vmem [#allocation5], %s226
        %v228 = vld [vmem:[%s227] sm:$0xff]
        %v229 = vld [vmem:[%s227 + $0x8] sm:$0xff]
        %v230 = vld [vmem:[%s227 + $0x10] sm:$0xff]
        %v231 = vld [vmem:[%s227 + $0x18] sm:$0xff]
        %v232 = vld [vmem:[%s227 + $0x20] sm:$0xff]
        %v233 = vld [vmem:[%s227 + $0x28] sm:$0xff]
        %v234 = vld [vmem:[%s227 + $0x30] sm:$0xff]
        %v235 = vld [vmem:[%s227 + $0x38] sm:$0xff]
        %v236 = vld [vmem:[%s227 + $0x40] sm:$0xff]
        %v237 = vld [vmem:[%s227 + $0x48] sm:$0xff]
        %v238 = vld [vmem:[%s227 + $0x50] sm:$0xff]
        %v239 = vld [vmem:[%s227 + $0x58] sm:$0xff]
        %v240 = vld [vmem:[%s227 + $0x60] sm:$0xff]
        %v241 = vld [vmem:[%s227 + $0x68] sm:$0xff]
        %v242 = vld [vmem:[%s227 + $0x70] sm:$0xff]
        %v243 = vld [vmem:[%s227 + $0x78] sm:$0xff]
        %v244 = vld [vmem:[#allocation7] sm:$0xff]
        %v245 = vld [vmem:[#allocation7 + $0x8] sm:$0xff]
        %v246 = vld [vmem:[#allocation7 + $0x10] sm:$0xff]
        %v247 = vld [vmem:[#allocation7 + $0x18] sm:$0xff]
        %v248 = vld [vmem:[#allocation7 + $0x20] sm:$0xff]
        %v249 = vld [vmem:[#allocation7 + $0x28] sm:$0xff]
        %v250 = vld [vmem:[#allocation7 + $0x30] sm:$0xff]
        %v251 = vld [vmem:[#allocation7 + $0x38] sm:$0xff]
        %v252 = vld [vmem:[#allocation7 + $0x40] sm:$0xff]
        %v253 = vld [vmem:[#allocation7 + $0x48] sm:$0xff]
        %v254 = vld [vmem:[#allocation7 + $0x50] sm:$0xff]
        %v255 = vld [vmem:[#allocation7 + $0x58] sm:$0xff]
        %v256 = vld [vmem:[#allocation7 + $0x60] sm:$0xff]
        %v257 = vld [vmem:[#allocation7 + $0x68] sm:$0xff]
        %v258 = vld [vmem:[#allocation7 + $0x70] sm:$0xff]
        %v259 = vld [vmem:[#allocation7 + $0x78] sm:$0xff]
        %v260 = vld [vmem:[%s178] sm:$0xff]
        %v261 = vld [vmem:[%s178 + $0x8] sm:$0xff]
        %v262 = vld [vmem:[%s178 + $0x10] sm:$0xff]
        %v263 = vld [vmem:[%s178 + $0x18] sm:$0xff]
        %v264 = vld [vmem:[%s178 + $0x20] sm:$0xff]
        %v265 = vld [vmem:[%s178 + $0x28] sm:$0xff]
        %v266 = vld [vmem:[%s178 + $0x30] sm:$0xff]
        %v267 = vld [vmem:[%s178 + $0x38] sm:$0xff]
        %v268 = vld [vmem:[%s178 + $0x40] sm:$0xff]
        %v269 = vld [vmem:[%s178 + $0x48] sm:$0xff]
        %v270 = vld [vmem:[%s178 + $0x50] sm:$0xff]
        %v271 = vld [vmem:[%s178 + $0x58] sm:$0xff]
        %v272 = vld [vmem:[%s178 + $0x60] sm:$0xff]
        %v273 = vld [vmem:[%s178 + $0x68] sm:$0xff]
        %v274 = vld [vmem:[%s178 + $0x70] sm:$0xff]
        %v275 = vld [vmem:[%s178 + $0x78] sm:$0xff]
        %276 = vmatpush.msra.mxu0 %v243
        %277 = vmatpush.msra.mxu0 %v242
        %278 = vmatpush.msra.mxu0 %v241
        %279 = vmatpush.msra.mxu0 %v240
        %280 = vmatpush.msra.mxu0 %v239
        %281 = vmatpush.msra.mxu0 %v238
        %282 = vmatpush.msra.mxu0 %v237
        %283 = vmatpush.msra.mxu0 %v236
        %284 = vmatpush.msra.mxu0 %v235
        %285 = vmatpush.msra.mxu0 %v234
        %286 = vmatpush.msra.mxu0 %v233
        %287 = vmatpush.msra.mxu0 %v232
        %288 = vmatpush.msra.mxu0 %v231
        %289 = vmatpush.msra.mxu0 %v230
        %290 = vmatpush.msra.mxu0 %v229
        %291 = vmatpush.msra.mxu0 %v228
        %292 = vmatmul.f32.gmra.mxu0 %v260
        %v293 = vpop.f32.mrf.mxu0
        %v294 = vadd.f32 0.0, %v293
        %295 = vmatmul.f32.gmra.mxu0 %v261
        %v296 = vpop.f32.mrf.mxu0
        %v297 = vadd.f32 0.0, %v296
        %298 = vmatmul.f32.gmra.mxu0 %v262
        %v299 = vpop.f32.mrf.mxu0
        %v300 = vadd.f32 0.0, %v299
        %301 = vmatmul.f32.gmra.mxu0 %v263
        %v302 = vpop.f32.mrf.mxu0
        %v303 = vadd.f32 0.0, %v302
        %304 = vmatmul.f32.gmra.mxu0 %v264
        %v305 = vpop.f32.mrf.mxu0
        %v306 = vadd.f32 0.0, %v305
        %307 = vmatmul.f32.gmra.mxu0 %v265
        %v308 = vpop.f32.mrf.mxu0
        %v309 = vadd.f32 0.0, %v308
        %310 = vmatmul.f32.gmra.mxu0 %v266
        %v311 = vpop.f32.mrf.mxu0
        %v312 = vadd.f32 0.0, %v311
        %313 = vmatmul.f32.gmra.mxu0 %v267
        %v314 = vpop.f32.mrf.mxu0
        %v315 = vadd.f32 0.0, %v314
        %316 = vmatmul.f32.gmra.mxu0 %v268
        %v317 = vpop.f32.mrf.mxu0
        %v318 = vadd.f32 0.0, %v317
        %319 = vmatmul.f32.gmra.mxu0 %v269
        %v320 = vpop.f32.mrf.mxu0
        %v321 = vadd.f32 0.0, %v320
        %322 = vmatmul.f32.gmra.mxu0 %v270
        %v323 = vpop.f32.mrf.mxu0
        %v324 = vadd.f32 0.0, %v323
        %325 = vmatmul.f32.gmra.mxu0 %v271
        %v326 = vpop.f32.mrf.mxu0
        %v327 = vadd.f32 0.0, %v326
        %328 = vmatmul.f32.gmra.mxu0 %v272
        %v329 = vpop.f32.mrf.mxu0
        %v330 = vadd.f32 0.0, %v329
        %331 = vmatmul.f32.gmra.mxu0 %v273
        %v332 = vpop.f32.mrf.mxu0
        %v333 = vadd.f32 0.0, %v332
        %334 = vmatmul.f32.gmra.mxu0 %v274
        %v335 = vpop.f32.mrf.mxu0
        %v336 = vadd.f32 0.0, %v335
        %337 = vmatmul.f32.gmra.mxu0 %v275
        %v338 = vpop.f32.mrf.mxu0
        %v339 = vadd.f32 0.0, %v338
        %340 = vdwg.mxu0
        %v341 = vadd.f32 %v244, %v294
        %v342 = vadd.f32 %v245, %v297
        %v343 = vadd.f32 %v246, %v300
        %v344 = vadd.f32 %v247, %v303
        %v345 = vadd.f32 %v248, %v306
        %v346 = vadd.f32 %v249, %v309
        %v347 = vadd.f32 %v250, %v312
        %v348 = vadd.f32 %v251, %v315
        %v349 = vadd.f32 %v252, %v318
        %v350 = vadd.f32 %v253, %v321
        %v351 = vadd.f32 %v254, %v324
        %v352 = vadd.f32 %v255, %v327
        %v353 = vadd.f32 %v256, %v330
        %v354 = vadd.f32 %v257, %v333
        %v355 = vadd.f32 %v258, %v336
        %v356 = vadd.f32 %v259, %v339
        %357 = vst [vmem:[#allocation7] sm:$0xff] %v341
        %358 = vst [vmem:[#allocation7 + $0x8] sm:$0xff] %v342
        %359 = vst [vmem:[#allocation7 + $0x10] sm:$0xff] %v343
        %360 = vst [vmem:[#allocation7 + $0x18] sm:$0xff] %v344
        %361 = vst [vmem:[#allocation7 + $0x20] sm:$0xff] %v345
        %362 = vst [vmem:[#allocation7 + $0x28] sm:$0xff] %v346
        %363 = vst [vmem:[#allocation7 + $0x30] sm:$0xff] %v347
        %364 = vst [vmem:[#allocation7 + $0x38] sm:$0xff] %v348
        %365 = vst [vmem:[#allocation7 + $0x40] sm:$0xff] %v349
        %366 = vst [vmem:[#allocation7 + $0x48] sm:$0xff] %v350
        %367 = vst [vmem:[#allocation7 + $0x50] sm:$0xff] %v351
        %368 = vst [vmem:[#allocation7 + $0x58] sm:$0xff] %v352
        %369 = vst [vmem:[#allocation7 + $0x60] sm:$0xff] %v353
        %370 = vst [vmem:[#allocation7 + $0x68] sm:$0xff] %v354
        %371 = vst [vmem:[#allocation7 + $0x70] sm:$0xff] %v355
        %372 = vst [vmem:[#allocation7 + $0x78] sm:$0xff] %v356
        // Predicated region
        $region41: #{tpu_custom_call.1} parent=27 // pred_check
          %p373 = pneg %p106
        $region42: #{tpu_custom_call.1} parent=27 // pred_check_branch
          %375 = sbr.rel (%p373) target = $region44
        $region43: #{tpu_custom_call.1} parent=27 // pred_region
          %s376 = smul.u32 16, %s23
          %378 = vsyncadd [#allocation4], 0
          %s379 = smul.addr %s376, 8
          %s380 = scalar_lea.hbm %s2, %s379
          %s381 = sshll.u32 [#allocation7], 4
          %s382 = int_to_ptr.vmem [resolvable:$true] %s381
          %s383 = sshll.u32 %s380, 4
          %s384 = int_to_ptr.hbm [resolvable:$true] %s383
          %389 = dma.vmem_to_hbm [thread:$0]  %s382, 2048, %s384, [#allocation4], 128, 128, 8
        $region44: #{tpu_custom_call.1} parent=27 // pred_fallthru
          _
        // Predicated region
        $region45: #{tpu_custom_call.1} parent=27 // pred_check
          %p390 = pneg %p106
        $region46: #{tpu_custom_call.1} parent=27 // pred_check_branch
          %392 = sbr.rel (%p390) target = $region48
        $region47: #{tpu_custom_call.1} parent=27 // pred_region
          %394 = dma.done [#allocation4], 2048
        $region48: #{tpu_custom_call.1} parent=27 // pred_fallthru
          _
      $region28: #{tpu_custom_call.1} parent=5 // pred_fallthru
        _
      %p395 = scmp.le.s32.totalorder 2, %s13
      // Predicated region
      $region49: #{tpu_custom_call.1} parent=5 // pred_check
        %p396 = pneg %p395
      $region50: #{tpu_custom_call.1} parent=5 // pred_check_branch
        %398 = sbr.rel (%p396) target = $region52
      $region51: #{tpu_custom_call.1} parent=5 // pred_region
        %s399 = ssub.s32 %s13, 2
      $region52: #{tpu_custom_call.1} parent=5 // pred_fallthru
        _
    $region6: #{tpu_custom_call.1} parent=1 // loop_footer
      %s17 = sadd.s32 1, %s13
    $region7: #{tpu_custom_call.1} parent=1 // loop_footer_branch
      %12 = sbr.rel target = $region3
    $region8: #{tpu_custom_call.1} parent=1 // loop_exit
      _
    %400 = vsyncpa [#allocation3], 1
    %s401 = scalar_lea.sflag [#allocation3], 1
    %402 = vsyncpa %s401, 1
    %403 = vsyncpa [#allocation6], 1
    %404 = vsyncpa [#allocation4], 1
    %s405 = scalar_lea.sflag [#allocation4], 1
    %406 = vsyncpa %s405, 1

</llo_original>
